<compile_context>
chip_gen: v5e
topology: v5e:2x2
jax: 0.10.0
libtpu: 0.0.40
codegen_flags: <defaults>
</compile_context>

<pallas_src>
import functools

import jax
import jax.numpy as jnp
from jax.experimental import pallas as pl
from jax.experimental.pallas import tpu as pltpu


def _round_up(v, m):
    return ((v + m - 1) // m) * m


def _vmem_limit_bytes():
    """Scoped-VMEM limit to request (v5e's default is only 16 MiB)."""
    try:
        cap = int(pltpu.get_tpu_info().vmem_capacity_bytes)
    except Exception:  # unknown chip / interpret mode
        cap = 64 * 1024 * 1024
    # NOTE: assumed per-TensorCore (128 MiB on v5e/v6e, 64 MiB on v7x). If a
    # runtime ever reports per-chip capacity on dual-TC parts this would be 2x
    # too large and should be halved here.
    # 128 MiB parts -> ~104 MiB, 64 MiB parts -> 48 MiB.
    return cap - min(cap // 4, 24 * 1024 * 1024)


def _tile_cap_bytes(itemsize, vmem_limit):
    """Largest input tile (bytes, native dtype) whose pipelined working set
    (2x in + 2x out native buffers plus ~5 f32 temporaries for the fused
    elementwise chain) fits inside ~75% of the scoped VMEM limit."""
    budget = (vmem_limit * 3) // 4
    return budget // (4 + 20 // itemsize)


def _cost_estimate(elems, itemsize, write_x=True):
    # Advisory only: lets XLA schedule surrounding ops sensibly around this
    # HBM-streaming custom call.
    return pl.CostEstimate(
        flops=12 * elems,
        transcendentals=elems if write_x else 0,
        bytes_accessed=(2 if write_x else 1) * elems * itemsize,
    )


def _gate_and_store(x_native, x_f32, d_f32, inv_f32, o_ref, bf16_gate):
    """o = x * sigmoid(d^2 * inv + 0.5). For bf16 callers the gate math runs
    in bf16 (reductions upstream stay f32); exact f32 chain otherwise."""
    if bf16_gate:
        d = d_f32.astype(jnp.bfloat16)
        y = d * d * inv_f32.astype(jnp.bfloat16) + 0.5
        o_ref[...] = (x_native * jax.nn.sigmoid(y)).astype(o_ref.dtype)
    else:
        y = d_f32 * d_f32 * inv_f32 + 0.5
        o_ref[...] = (x_f32 * jax.nn.sigmoid(y)).astype(o_ref.dtype)


# --------------------------------------------------------------------------
# Single-pass "rows" path: (row_block, H*W) tiles, one (b, c) plane per row.
# --------------------------------------------------------------------------
def _simam_rows_kernel(x_ref, o_ref, *, inv_n, e_lambda, bf16_gate):
    xn = x_ref[...]
    x = xn.astype(jnp.float32)
    mu = jnp.mean(x, axis=-1, keepdims=True)              # lane-axis reduce
    d = x - mu
    s = jnp.sum(d * d, axis=-1, keepdims=True)            # sum of sq dev
    inv = pl.reciprocal(4.0 * (s * inv_n + e_lambda), approx=False)
    _gate_and_store(xn, x, d, inv, o_ref, bf16_gate)


def _simam_rows_pass(x2d, inv_n, e_lambda, row_block, vmem_limit, bf16_gate):
    rows, hw = x2d.shape
    kernel = functools.partial(_simam_rows_kernel, inv_n=inv_n,
                               e_lambda=e_lambda, bf16_gate=bf16_gate)
    return pl.pallas_call(
        kernel,
        out_shape=jax.ShapeDtypeStruct((rows, hw), x2d.dtype),
        grid_spec=pltpu.PrefetchScalarGridSpec(
            num_scalar_prefetch=0,
            grid=(pl.cdiv(rows, row_block),),
            in_specs=[pl.BlockSpec((row_block, hw), lambda i: (i, 0))],
            out_specs=pl.BlockSpec((row_block, hw), lambda i: (i, 0)),
        ),
        compiler_params=pltpu.CompilerParams(
            dimension_semantics=("parallel",),
            vmem_limit_bytes=vmem_limit,
        ),
        cost_estimate=_cost_estimate(rows * hw, x2d.dtype.itemsize),
    )(x2d)


# --------------------------------------------------------------------------
# Single-pass "plane" path: one (b, c) plane per grid step as (1, hw/128, 128)
# tiles -- decouples tile size from the 8-row sublane granularity and gives
# B*C grid steps that shard across both TensorCores on v7x.
# --------------------------------------------------------------------------
def _simam_plane_kernel(x_ref, o_ref, *, inv_hw, inv_n, e_lambda, bf16_gate):
    xn = x_ref[...]
    x = xn.astype(jnp.float32)
    # Lane reduce then sublane reduce (two single-axis reductions).
    mu = jnp.sum(jnp.sum(x, axis=2, keepdims=True), axis=1, keepdims=True) * inv_hw
    d = x - mu
    s = jnp.sum(jnp.sum(d * d, axis=2, keepdims=True), axis=1, keepdims=True)
    inv = pl.reciprocal(4.0 * (s * inv_n + e_lambda), approx=False)
    _gate_and_store(xn, x, d, inv, o_ref, bf16_gate)


def _simam_plane_pass(x3d, inv_n, e_lambda, vmem_limit, bf16_gate):
    rows, sl, ll = x3d.shape
    kernel = functools.partial(_simam_plane_kernel, inv_hw=1.0 / (sl * ll),
                               inv_n=inv_n, e_lambda=e_lambda,
                               bf16_gate=bf16_gate)
    return pl.pallas_call(
        kernel,
        out_shape=jax.ShapeDtypeStruct((rows, sl, ll), x3d.dtype),
        grid_spec=pltpu.PrefetchScalarGridSpec(
            num_scalar_prefetch=0,
            grid=(rows,),
            in_specs=[pl.BlockSpec((1, sl, ll), lambda i: (i, 0, 0))],
            out_specs=pl.BlockSpec((1, sl, ll), lambda i: (i, 0, 0)),
        ),
        compiler_params=pltpu.CompilerParams(
            dimension_semantics=("parallel",),
            vmem_limit_bytes=vmem_limit,
        ),
        cost_estimate=_cost_estimate(rows * sl * ll, x3d.dtype.itemsize),
    )(x3d)


# --------------------------------------------------------------------------
# Two-pass fallback: only for planes too large for a whole-plane VMEM tile (or
# ragged H*W with huge planes). Pass 1 accumulates per-row shifted moments;
# pass 2 re-streams x and applies the gate.
# --------------------------------------------------------------------------
def _simam_stats_kernel(x_ref, shift_ref, sum_ref, ssq_ref, *, hw, hw_block):
    j = pl.program_id(1)

    @pl.when(j == 0)
    def _():
        # Per-row shift (first spatial element) keeps the shifted-moment
        # formula numerically stable (avoids catastrophic cancellation).
        shift_ref[...] = x_ref[:, 0:1].astype(jnp.float32)
        sum_ref[...] = jnp.zeros_like(sum_ref)
        ssq_ref[...] = jnp.zeros_like(ssq_ref)

    x = x_ref[...].astype(jnp.float32) - shift_ref[...]
    if hw % hw_block != 0:
        # Ragged last H*W tile: zero out-of-range lanes before accumulating.
        lane = jax.lax.broadcasted_iota(jnp.int32, x.shape, 1)
        x = jnp.where(j * hw_block + lane < hw, x, 0.0)
    sum_ref[...] += jnp.sum(x, axis=-1, keepdims=True)
    ssq_ref[...] += jnp.sum(x * x, axis=-1, keepdims=True)


def _simam_apply_kernel(x_ref, shift_ref, sum_ref, ssq_ref, o_ref, *,
                        inv_hw, inv_n, e_lambda, bf16_gate):
    xn = x_ref[...]
    x = xn.astype(jnp.float32)
    s1 = sum_ref[...]
    s2 = ssq_ref[...]
    mu = shift_ref[...] + s1 * inv_hw
    # sum((x - mu)^2) == s2 - s1^2/hw with moments taken about the per-row
    # shift; clamp tiny negative rounding.
    energy = jnp.maximum(s2 - s1 * s1 * inv_hw, 0.0)
    inv = pl.reciprocal(4.0 * (energy * inv_n + e_lambda), approx=False)
    d = x - mu
    _gate_and_store(xn, x, d, inv, o_ref, bf16_gate)


def _simam_two_pass(x2d, inv_n, e_lambda, vmem_limit, sub, bf16_gate):
    rows, hw = x2d.shape
    itemsize = x2d.dtype.itemsize
    row_block = rows if rows <= sub else sub
    # Size hw_block to the full tile budget (amortizes ~0.35us per grid step).
    tile_cap = _tile_cap_bytes(itemsize, vmem_limit)
    hw_block = (tile_cap // (row_block * itemsize)) // 128 * 128
    hw_block = min(hw_block, max(128, (hw // 128) * 128))
    hw_block = max(hw_block, 128)
    grid = (pl.cdiv(rows, row_block), pl.cdiv(hw, hw_block))

    stats_kernel = functools.partial(_simam_stats_kernel, hw=hw, hw_block=hw_block)
    shift, s1, s2 = pl.pallas_call(
        stats_kernel,
        out_shape=(
            jax.ShapeDtypeStruct((rows, 1), jnp.float32),
            jax.ShapeDtypeStruct((rows, 1), jnp.float32),
            jax.ShapeDtypeStruct((rows, 1), jnp.float32),
        ),
        grid_spec=pltpu.PrefetchScalarGridSpec(
            num_scalar_prefetch=0,
            grid=grid,
            in_specs=[pl.BlockSpec((row_block, hw_block), lambda i, j: (i, j))],
            out_specs=(
                pl.BlockSpec((row_block, 1), lambda i, j: (i, 0)),
                pl.BlockSpec((row_block, 1), lambda i, j: (i, 0)),
                pl.BlockSpec((row_block, 1), lambda i, j: (i, 0)),
            ),
        ),
        compiler_params=pltpu.CompilerParams(
            dimension_semantics=("parallel", "arbitrary"),
            vmem_limit_bytes=vmem_limit,
        ),
        cost_estimate=_cost_estimate(rows * hw, itemsize, write_x=False),
    )(x2d)

    apply_kernel = functools.partial(
        _simam_apply_kernel, inv_hw=1.0 / hw, inv_n=inv_n,
        e_lambda=e_lambda, bf16_gate=bf16_gate)
    return pl.pallas_call(
        apply_kernel,
        out_shape=jax.ShapeDtypeStruct((rows, hw), x2d.dtype),
        grid_spec=pltpu.PrefetchScalarGridSpec(
            num_scalar_prefetch=0,
            grid=grid,
            in_specs=[
                # Per-chunk compute is tiny vs the DMA, so a deeper input
                # buffer hides DMA jitter on this latency-limited pass.
                pl.BlockSpec((row_block, hw_block), lambda i, j: (i, j),
                             pipeline_mode=pl.Buffered(3)),
                pl.BlockSpec((row_block, 1), lambda i, j: (i, 0)),
                pl.BlockSpec((row_block, 1), lambda i, j: (i, 0)),
                pl.BlockSpec((row_block, 1), lambda i, j: (i, 0)),
            ],
            out_specs=pl.BlockSpec((row_block, hw_block), lambda i, j: (i, j)),
        ),
        compiler_params=pltpu.CompilerParams(
            dimension_semantics=("parallel", "parallel"),
            vmem_limit_bytes=vmem_limit,
        ),
        cost_estimate=_cost_estimate(rows * hw, itemsize),
    )(x2d, shift, s1, s2)


# --------------------------------------------------------------------------
# Wrapper
# --------------------------------------------------------------------------
def _choose_row_block(rows, hw, itemsize, vmem_limit, sub):
    if rows <= sub:
        return rows  # single block == full dim (legal even when rows < 8)
    # Keep tiles in the ~1-4 MiB sweet spot: past the mem-bound knee but with
    # VMEM headroom for the double-buffered pipeline ...
    tile_cap = min(_tile_cap_bytes(itemsize, vmem_limit), 4 * 1024 * 1024)
    rb = max(sub, (tile_cap // (hw * itemsize)) // sub * sub)
    # ... and aim for >= 8 grid steps (>= 4 per TensorCore on dual-TC v7x) so
    # the BlockSpec pipeline always has a prefetch / writeback in flight.
    rb = min(rb, max(sub, _round_up(pl.cdiv(rows, 8), sub)))
    rb = min(rb, (rows // sub) * sub)
    return rb


def simam(x, e_lambda=1e-4, *, _force_path=None):
    """SimAM forward pass. x: (B, C, H, W) array (NCHW), any float dtype."""
    b, c, h, w = x.shape
    rows = b * c
    hw = h * w
    inv_n = 1.0 / float(hw - 1)
    itemsize = x.dtype.itemsize
    bf16_gate = x.dtype == jnp.bfloat16

    vmem_limit = _vmem_limit_bytes()
    tile_cap = _tile_cap_bytes(itemsize, vmem_limit)
    # Sublane granularity for the row axis (packed dtypes need 16/32 rows).
    sub = 8 if itemsize >= 4 else (16 if itemsize == 2 else 32)

    plane_bytes = hw * itemsize
    min_rows = rows if rows <= sub else sub
    fits_rows = min_rows * plane_bytes <= tile_cap
    plane_ok = (hw % 128 == 0) and plane_bytes <= tile_cap
    # Prefer the per-plane layout once a single plane is >= 1 MiB: the tile is
    # already past the mem-bound knee and the grid gets B*C parallel steps.
    prefer_plane = plane_ok and plane_bytes >= (1 << 20)

    if _force_path is not None:
        path = _force_path
    elif prefer_plane or (plane_ok and not fits_rows):
        path = "plane"
    elif fits_rows:
        path = "rows"
    else:
        path = "twopass"

    if path == "plane":
        x3d = x.reshape(rows, hw // 128, 128)   # contiguous collapse -- free
        out = _simam_plane_pass(x3d, inv_n, e_lambda, vmem_limit, bf16_gate)
        return out.reshape(b, c, h, w)

    x2d = x.reshape(rows, hw)
    if path == "rows":
        row_block = _choose_row_block(rows, hw, itemsize, vmem_limit, sub)
        out2d = _simam_rows_pass(x2d, inv_n, e_lambda, row_block, vmem_limit,
                                 bf16_gate)
    else:
        out2d = _simam_two_pass(x2d, inv_n, e_lambda, vmem_limit, sub,
                                bf16_gate)
    return out2d.reshape(b, c, h, w)


def simam_reference(x, e_lambda=1e-4):
    """Pure-JAX reference mirroring the PyTorch forward."""
    b, c, h, w = x.shape
    n = w * h - 1
    mu = jnp.mean(x, axis=(2, 3), keepdims=True)
    d2 = (x - mu) ** 2
    y = d2 / (4.0 * (jnp.sum(d2, axis=(2, 3), keepdims=True) / n + e_lambda)) + 0.5
    return x * jax.nn.sigmoid(y)


if __name__ == "__main__":
    key = jax.random.PRNGKey(0)
    B, C, H, W = 2, 4, 16, 16
    x = jax.random.normal(key, (B, C, H, W), dtype=jnp.float32)

    out = jax.block_until_ready(simam(x))
    assert out.shape == (B, C, H, W)
    assert jnp.allclose(out, simam_reference(x), atol=1e-5, rtol=1e-5), \
        "rows-path mismatch vs reference"

    # Also exercise the other code paths at small shapes (forced; normally
    # they only trigger for large spatial planes).
    xp = jax.random.normal(jax.random.PRNGKey(1), (2, 4, 32, 32), jnp.float32)
    outp = jax.block_until_ready(simam(xp, _force_path="plane"))
    assert jnp.allclose(outp, simam_reference(xp), atol=1e-5, rtol=1e-5), \
        "plane-path mismatch vs reference"

    xt = jax.random.normal(jax.random.PRNGKey(2), (2, 4, 20, 20), jnp.float32)
    outt = jax.block_until_ready(simam(xt, _force_path="twopass"))
    assert jnp.allclose(outt, simam_reference(xt), atol=1e-5, rtol=1e-5), \
        "two-pass-path mismatch vs reference"

    print("KERNEL_OK")
</pallas_src>

<mosaic_0001>
module attributes {stable_mosaic.version = 11 : i64} {
  func.func @_simam_rows_kernel(%arg0: i32, %arg1: memref<8x256xf32, #tpu.memory_space<vmem>>, %arg2: memref<8x256xf32, #tpu.memory_space<vmem>>) attributes {dimension_semantics = [#tpu.dimension_semantics<parallel>], iteration_bounds = array<i64: 1>, scalar_prefetch = 0 : i64, scratch_operands = 0 : i64, tpu.core_type = #tpu.core_type<tc>, window_params = [{transform_indices = @transform_0, window_bounds = array<i64: 8, 256>}, {transform_indices = @transform_1, window_bounds = array<i64: 8, 256>}]} {
    %c0 = arith.constant 0 : index
    %c0_0 = arith.constant 0 : index
    %0 = vector.load %arg1[%c0, %c0_0] : memref<8x256xf32, #tpu.memory_space<vmem>>, vector<8x256xf32>
    %cst = arith.constant dense<0.000000e+00> : vector<8xf32>
    %1 = vector.multi_reduction <add>, %0, %cst [1] : vector<8x256xf32> to vector<8xf32>
    %2 = vector.shape_cast %1 : vector<8xf32> to vector<8x1xf32>
    %cst_1 = arith.constant 2.560000e+02 : f32
    %3 = vector.broadcast %cst_1 : f32 to vector<8x1xf32>
    %4 = arith.divf %2, %3 : vector<8x1xf32>
    %5 = vector.broadcast %4 : vector<8x1xf32> to vector<8x256xf32>
    %6 = arith.subf %0, %5 : vector<8x256xf32>
    %7 = arith.mulf %6, %6 : vector<8x256xf32>
    %cst_2 = arith.constant dense<0.000000e+00> : vector<8xf32>
    %8 = vector.multi_reduction <add>, %7, %cst_2 [1] : vector<8x256xf32> to vector<8xf32>
    %9 = vector.shape_cast %8 : vector<8xf32> to vector<8x1xf32>
    %cst_3 = arith.constant 0.00392156886 : f32
    %10 = vector.broadcast %cst_3 : f32 to vector<8x1xf32>
    %11 = arith.mulf %9, %10 : vector<8x1xf32>
    %cst_4 = arith.constant 9.99999974E-5 : f32
    %12 = vector.broadcast %cst_4 : f32 to vector<8x1xf32>
    %13 = arith.addf %11, %12 : vector<8x1xf32>
    %cst_5 = arith.constant 4.000000e+00 : f32
    %14 = vector.broadcast %cst_5 : f32 to vector<8x1xf32>
    %15 = arith.mulf %14, %13 : vector<8x1xf32>
    %16 = tpu.reciprocal %15 : vector<8x1xf32> -> vector<8x1xf32>
    %17 = arith.mulf %6, %6 : vector<8x256xf32>
    %18 = vector.broadcast %16 : vector<8x1xf32> to vector<8x256xf32>
    %19 = arith.mulf %17, %18 : vector<8x256xf32>
    %cst_6 = arith.constant 5.000000e-01 : f32
    %20 = vector.broadcast %cst_6 : f32 to vector<8x256xf32>
    %21 = arith.addf %19, %20 : vector<8x256xf32>
    %22 = arith.negf %21 : vector<8x256xf32>
    %23 = math.exp %22 : vector<8x256xf32>
    %cst_7 = arith.constant 1.000000e+00 : f32
    %24 = vector.broadcast %cst_7 : f32 to vector<8x256xf32>
    %25 = arith.addf %24, %23 : vector<8x256xf32>
    %26 = arith.divf %24, %25 : vector<8x256xf32>
    %27 = arith.mulf %0, %26 : vector<8x256xf32>
    %c0_8 = arith.constant 0 : index
    %c0_9 = arith.constant 0 : index
    %28 = vector.load %arg2[%c0_8, %c0_9] : memref<8x256xf32, #tpu.memory_space<vmem>>, vector<8x256xf32>
    tpu.vector_store %arg2[%c0_8, %c0_9], %27 {strides = array<i32>} : memref<8x256xf32, #tpu.memory_space<vmem>>, vector<8x256xf32>,
    return
  }
  func.func @transform_0(%arg0: i32) -> (i32, i32) {
    %c0_i32 = arith.constant 0 : i32
    %c0_i32_0 = arith.constant 0 : i32
    return %arg0, %c0_i32 : i32, i32
  }
  func.func @transform_1(%arg0: i32) -> (i32, i32) {
    %c0_i32 = arith.constant 0 : i32
    %c0_i32_0 = arith.constant 0 : i32
    return %arg0, %c0_i32 : i32, i32
  }
}

</mosaic_0001>

<llo_original>
// kernel: tpu_custom_call.1
$region0: #{tpu_custom_call.1}
  #allocation0 [shape = 'u32[]', space=smem, size = 0x4, offset = 0x4, fixed_abs, tag = 'smem constant byte address 0x4 - core index']
  #allocation1 [shape = 'u32[72,128]{1,0:T(1,128)}', space=vmem, size = 0x9000, scoped, tag = 'internal scratch']
  %s0 = inlined_call_operand.hbm [shape: f32[8,256], index: 0, kind: input, shape index: {}]
  %s1 = inlined_call_operand.hbm [shape: f32[8,256], index: 1, kind: output, shape index: {}]
  %s2 = sld [smem:[#allocation0]]
  $region18: #{tpu_custom_call.1} parent=0
    _
  %s4 = ssub.s32 1, %s2
  %s5 = scalar_select 0, %s4, %s2
  $region1: #{tpu_custom_call.1} parent=0
    #allocation2 [shape = 'u8[8192]{0}', space=vmem, size = 0x2000, scoped, tag = 'input window, operand 0, single buffered']
    #allocation3 [shape = 's32[1]{0}', space=sflag, size = 0x4, scoped, tag = 'scoped memory for tpu_custom_call.1']
    #allocation4 [shape = 's32[1]{0}', space=sflag, size = 0x4, scoped, tag = 'scoped memory for tpu_custom_call.1']
    #allocation5 [shape = 'u8[8192]{0}', space=vmem, size = 0x2000, scoped, tag = 'output window, operand 0, single buffered']
    %6 = vsyncpa [#allocation3], 0
    %7 = vsyncpa [#allocation4], 0
    // Predicated region
    $region2: #{tpu_custom_call.1} parent=1 // pred_check
      _
    $region3: #{tpu_custom_call.1} parent=1 // pred_check_branch
      %9 = sbr.rel (0) target = $region5
    $region4: #{tpu_custom_call.1} parent=1 // pred_region
      %11 = vsyncadd [#allocation3], 0
      %s13 = sshll.u32 %s0, 4
      %s14 = int_to_ptr.hbm [resolvable:$true] %s13
      %s15 = sshll.u32 [#allocation2], 4
      %s16 = int_to_ptr.vmem [resolvable:$true] %s15
      %18 = dma.hbm_to_vmem [thread:$0]  %s14, 256, %s16, [#allocation3]
    $region5: #{tpu_custom_call.1} parent=1 // pred_fallthru
      _
    // Predicated region
    $region6: #{tpu_custom_call.1} parent=1 // pred_check
      _
    $region7: #{tpu_custom_call.1} parent=1 // pred_check_branch
      %20 = sbr.rel (0) target = $region9
    $region8: #{tpu_custom_call.1} parent=1 // pred_region
      %22 = dma.done [#allocation3], 256
    $region9: #{tpu_custom_call.1} parent=1 // pred_fallthru
      _
    %v23 = vld [vmem:[#allocation2] sm:$0xff]
    %v24 = vld [vmem:[#allocation2 + $0x8] sm:$0xff]
    %v25 = vadd.f32 %v23, %v24
    %26 = vadd.xlane.f32.xlu0 %v25
    %v27 = vpop.xlane.xlu0 %26
    %v28 = vrcp.pop 256.0
    %v29 = vmul.f32 256.0, %v28
    %v30 = vsub.f32 1.0, %v29
    %v31 = vmul.f32 %v28, %v30
    %v32 = vadd.f32 %v28, %v31
    %vm33 = vweird.f32 %v28
    %v34 = vsel %vm33, %v28, %v32
    %v35 = vmul.f32 %v27, %v34
    %v36 = vsub.f32 %v23, %v35
    %v37 = vsub.f32 %v24, %v35
    %v38 = vmul.f32 %v36, %v36
    %v39 = vmul.f32 %v37, %v37
    %v40 = vadd.f32 %v38, %v39
    %41 = vadd.xlane.f32.xlu0 %v40
    %v42 = vpop.xlane.xlu0 %41
    %v43 = vmul.f32 %v42, 0.003921569
    %v44 = vadd.f32 %v43, 0.0001
    %v45 = vmul.f32 %v44, 4.0
    %v46 = vrcp.pop %v45
    %v47 = vmul.f32 %v45, %v46
    %v48 = vsub.f32 1.0, %v47
    %v49 = vmul.f32 %v46, %v48
    %v50 = vadd.f32 %v46, %v49
    %vm51 = vweird.f32 %v45
    %vm52 = vweird.f32 %v46
    %vm53 = vmor %vm51, %vm52
    %v54 = vsel %vm53, %v46, %v50
    %v55 = vand.u32 2147483647, %v45
    %vm56 = vcmp.eq.f32.partialorder %v55, 8.507059e+37
    %v57 = vand.u32 %v45, 2147483648
    %v58 = vor.u32 1.1754944e-38, %v57
    %v59 = vsel %vm56, %v58, %v54
    %v60 = vmul.f32 %v38, %v59
    %v61 = vmul.f32 %v39, %v59
    %v62 = vadd.f32 %v60, 0.5
    %v63 = vadd.f32 %v61, 0.5
    %v64 = vxor.u32 %v62, 2147483648
    %v65 = vxor.u32 %v63, 2147483648
    %v66 = vmul.f32 %v64, 1.442695
    %v67 = vpow.pop %v66
    %v68 = vmul.f32 %v65, 1.442695
    %v69 = vpow.pop %v68
    %v70 = vadd.f32 %v67, 1.0
    %v71 = vadd.f32 %v69, 1.0
    %v72 = vrcp.pop %v70
    %v73 = vmul.f32 %v70, %v72
    %v74 = vsub.f32 1.0, %v73
    %v75 = vmul.f32 %v72, %v74
    %v76 = vadd.f32 %v72, %v75
    %vm77 = vweird.f32 %v70
    %vm78 = vweird.f32 %v72
    %vm79 = vmor %vm77, %vm78
    %v80 = vsel %vm79, %v72, %v76
    %v81 = vand.u32 2147483647, %v70
    %vm82 = vcmp.eq.f32.partialorder %v81, 8.507059e+37
    %v83 = vand.u32 %v70, 2147483648
    %v84 = vor.u32 1.1754944e-38, %v83
    %v85 = vsel %vm82, %v84, %v80
    %v86 = vmul.f32 1.0, %v85
    %v87 = vrcp.pop %v71
    %v88 = vmul.f32 %v71, %v87
    %v89 = vsub.f32 1.0, %v88
    %v90 = vmul.f32 %v87, %v89
    %v91 = vadd.f32 %v87, %v90
    %vm92 = vweird.f32 %v71
    %vm93 = vweird.f32 %v87
    %vm94 = vmor %vm92, %vm93
    %v95 = vsel %vm94, %v87, %v91
    %v96 = vand.u32 2147483647, %v71
    %vm97 = vcmp.eq.f32.partialorder %v96, 8.507059e+37
    %v98 = vand.u32 %v71, 2147483648
    %v99 = vor.u32 1.1754944e-38, %v98
    %v100 = vsel %vm97, %v99, %v95
    %v101 = vmul.f32 1.0, %v100
    %v102 = vmul.f32 %v23, %v86
    %v103 = vmul.f32 %v24, %v101
    %104 = vst [vmem:[#allocation5] sm:$0xff] %v102
    %105 = vst [vmem:[#allocation5 + $0x8] sm:$0xff] %v103
    // Predicated region
    $region10: #{tpu_custom_call.1} parent=1 // pred_check
      _
    $region11: #{tpu_custom_call.1} parent=1 // pred_check_branch
      %107 = sbr.rel (0) target = $region13
    $region12: #{tpu_custom_call.1} parent=1 // pred_region
      %109 = vsyncadd [#allocation4], 0
      %s111 = sshll.u32 [#allocation5], 4
      %s112 = int_to_ptr.vmem [resolvable:$true] %s111
      %s113 = sshll.u32 %s1, 4
      %s114 = int_to_ptr.hbm [resolvable:$true] %s113
      %116 = dma.vmem_to_hbm [thread:$0]  %s112, 256, %s114, [#allocation4]
    $region13: #{tpu_custom_call.1} parent=1 // pred_fallthru
      _
    // Predicated region
    $region14: #{tpu_custom_call.1} parent=1 // pred_check
      _
    $region15: #{tpu_custom_call.1} parent=1 // pred_check_branch
      %118 = sbr.rel (0) target = $region17
    $region16: #{tpu_custom_call.1} parent=1 // pred_region
      %120 = dma.done [#allocation4], 256
    $region17: #{tpu_custom_call.1} parent=1 // pred_fallthru
      _
    %121 = vsyncpa [#allocation3], 1
    %122 = vsyncpa [#allocation4], 1

</llo_original>
